<compile_context>
chip_gen: v7x
topology: tpu7x:2x2x1
jax: 0.10.0
libtpu: 0.0.40
codegen_flags: <defaults>
</compile_context>

<pallas_src>
import jax
import jax.numpy as jnp
from jax import lax
from jax.experimental import pallas as pl
from jax.experimental.pallas import tpu as pltpu


def _round_up(x, m):
    return (x + m - 1) // m * m


def _classifier_kernel(x_ref, w1_ref, b1_ref, w2_ref, b2_ref, o_ref):
    """One batch tile.

    x_ref : (TB, in_f)  row-major activations (lane dim = in_f)
    w1_ref: (hid, in_f) fc_1 weight, PyTorch (out, in) layout
    b1_ref: (hid, 1)
    w2_ref: (C, hid)    fc_2 weight, PyTorch (out, in) layout
    b2_ref: (C, 1)
    o_ref : (C, TB)     class-major probabilities (lane dim = batch, dense)
    """
    x = x_ref[...]

    # fc_1: h^T = W1 @ x^T -> (hid, TB).  Contraction over in_f on both last
    # dims (q @ k.T pattern) -- no transpose of x is materialized.
    h = lax.dot_general(
        w1_ref[...], x,
        dimension_numbers=(((1,), (1,)), ((), ())),
        preferred_element_type=jnp.float32,
    ) + b1_ref[...]
    h = jnp.maximum(h, 0.0)

    # fc_2: logits^T = W2 @ h^T -> (C, TB).
    logits = jnp.dot(w2_ref[...], h, preferred_element_type=jnp.float32) + b2_ref[...]

    # Numerically stable softmax over the class axis (axis 0 == sublanes).
    # The cross-sublane max/sum go to the otherwise-idle XLU; every elementwise
    # op (exp, sub, mul) is lane-dense over the batch.
    m = jnp.max(logits, axis=0, keepdims=True)       # (1, TB)
    e = jnp.exp(logits - m)                           # (C, TB) on the EUP
    denom = jnp.sum(e, axis=0, keepdims=True)         # (1, TB), values in [1, C]
    inv = pl.reciprocal(denom, approx=True)           # EUP vrcp (free slot)
    inv = inv * (2.0 - denom * inv)                   # Newton step 1
    inv = inv * (2.0 - denom * inv)                   # Newton step 2 (~1e-10 rel err)
    o_ref[...] = (e * inv).astype(o_ref.dtype)


def narrow_feature_classifier(x, w1, b1, w2, b2, *, block_batch=8192):
    """Fused fc -> ReLU -> fc -> softmax (NarrowFeatureClassifier.forward).

    x : (B, in_f) f32
    w1: (hid, in_f), b1: (hid,)   -- PyTorch nn.Linear layouts (out, in) / (out,)
    w2: (C, hid),    b2: (C,)
    Returns (B, C) class probabilities (rows sum to 1).
    """
    B, in_f = x.shape
    hid = w1.shape[0]
    C = w2.shape[0]

    b1c = b1.reshape(hid, 1).astype(jnp.float32)
    b2c = b2.reshape(C, 1).astype(jnp.float32)

    # Batch tile: either the whole batch (single grid step) or a multiple of 128
    # so the lane-dense (C, TB) output block satisfies the (8, 128) tiling rule.
    if B <= block_batch:
        tb = B
    else:
        tb = max(128, (block_batch // 128) * 128)
    grid = (pl.cdiv(B, tb),)

    # Scoped-VMEM budget from the padded, double-buffered streaming tiles.
    padded_x_tile = _round_up(tb, 8) * _round_up(in_f, 128) * 4
    padded_o_tile = _round_up(C, 8) * _round_up(tb, 128) * 4
    vmem_limit_bytes = int(min(
        max(2 * (padded_x_tile + padded_o_tile) + (4 << 20), 32 << 20),
        64 << 20))

    flops = 2 * B * (in_f * hid + hid * C)
    bytes_accessed = 4 * (B * in_f + hid * in_f + hid + C * hid + C + B * C)
    transcendentals = B * C  # softmax exp

    out_cb = pl.pallas_call(
        _classifier_kernel,
        out_shape=jax.ShapeDtypeStruct((C, B), jnp.float32),
        grid=grid,
        in_specs=[
            # Batch-tiled activations stream through VMEM, double-buffered.
            pl.BlockSpec((tb, in_f), lambda i: (i, 0)),
            # Weights / biases: same block every step -> stay VMEM-resident.
            pl.BlockSpec((hid, in_f), lambda i: (0, 0)),
            pl.BlockSpec((hid, 1), lambda i: (0, 0)),
            pl.BlockSpec((C, hid), lambda i: (0, 0)),
            pl.BlockSpec((C, 1), lambda i: (0, 0)),
        ],
        out_specs=pl.BlockSpec((C, tb), lambda i: (0, i)),
        compiler_params=pltpu.CompilerParams(
            dimension_semantics=("parallel",),
            vmem_limit_bytes=vmem_limit_bytes,
        ),
        cost_estimate=pl.CostEstimate(
            flops=flops,
            transcendentals=transcendentals,
            bytes_accessed=bytes_accessed,
        ),
    )(x, w1, b1c, w2, b2c)

    # Module parity: return (B, C).  Callers that can consume class-major
    # (C, B) output should take out_cb directly and skip this transpose.
    return out_cb.T


def init_params(key, in_features, num_classes):
    """Deterministic init mimicking nn.Linear (uniform(-1/sqrt(fan_in), +)) in PyTorch layout."""
    hidden = in_features // 10
    k1, k2, k3, k4 = jax.random.split(key, 4)
    bound1 = 1.0 / jnp.sqrt(in_features)
    bound2 = 1.0 / jnp.sqrt(hidden)
    w1 = jax.random.uniform(k1, (hidden, in_features), jnp.float32, -bound1, bound1)
    b1 = jax.random.uniform(k2, (hidden,), jnp.float32, -bound1, bound1)
    w2 = jax.random.uniform(k3, (num_classes, hidden), jnp.float32, -bound2, bound2)
    b2 = jax.random.uniform(k4, (num_classes,), jnp.float32, -bound2, bound2)
    return w1, b1, w2, b2


def reference(x, w1, b1, w2, b2):
    h = jnp.maximum(x @ w1.T + b1, 0.0)
    logits = h @ w2.T + b2
    return jax.nn.softmax(logits, axis=-1)   # nn.Softmax() defaults to dim=1 for 2-D


if __name__ == "__main__":
    in_features = 40           # => hidden = in_features // 10 = 4
    num_classes = 10

    key = jax.random.PRNGKey(0)
    k_params, k_x1, k_x2 = jax.random.split(key, 3)
    w1, b1, w2, b2 = init_params(k_params, in_features, num_classes)

    # --- Small-batch path: single grid step, all-f32 ---
    batch = 16
    x = jax.random.normal(k_x1, (batch, in_features), jnp.float32)
    out = jax.block_until_ready(narrow_feature_classifier(x, w1, b1, w2, b2))
    ref = reference(x, w1, b1, w2, b2)
    assert out.shape == (batch, num_classes)
    assert jnp.allclose(out, ref, atol=1e-5, rtol=1e-5)
    assert jnp.allclose(jnp.sum(out, axis=-1), 1.0, atol=1e-5)

    # --- Multi-step batch grid: resident weights, ragged last block (cdiv path) ---
    big_batch = 200
    xb = jax.random.normal(k_x2, (big_batch, in_features), jnp.float32)
    out_b = jax.block_until_ready(
        narrow_feature_classifier(xb, w1, b1, w2, b2, block_batch=128))
    ref_b = reference(xb, w1, b1, w2, b2)
    assert out_b.shape == (big_batch, num_classes)
    assert jnp.allclose(out_b, ref_b, atol=1e-5, rtol=1e-5)
    assert jnp.allclose(jnp.sum(out_b, axis=-1), 1.0, atol=1e-5)

    print("KERNEL_OK")
</pallas_src>

<mosaic_0001>
module attributes {stable_mosaic.version = 11 : i64} {
  func.func @_classifier_kernel(%arg0: i32, %arg1: memref<16x40xf32, #tpu.memory_space<vmem>>, %arg2: memref<4x40xf32, #tpu.memory_space<vmem>>, %arg3: memref<4x1xf32, #tpu.memory_space<vmem>>, %arg4: memref<10x4xf32, #tpu.memory_space<vmem>>, %arg5: memref<10x1xf32, #tpu.memory_space<vmem>>, %arg6: memref<10x16xf32, #tpu.memory_space<vmem>>) attributes {dimension_semantics = [#tpu.dimension_semantics<parallel>], iteration_bounds = array<i64: 1>, scalar_prefetch = 0 : i64, scratch_operands = 0 : i64, tpu.core_type = #tpu.core_type<tc>, window_params = [{transform_indices = @transform_0, window_bounds = array<i64: 16, 40>}, {pipeline_mode = #tpu.pipeline_mode<synchronous>, transform_indices = @transform_1, window_bounds = array<i64: 4, 40>}, {pipeline_mode = #tpu.pipeline_mode<synchronous>, transform_indices = @transform_2, window_bounds = array<i64: 4, 1>}, {pipeline_mode = #tpu.pipeline_mode<synchronous>, transform_indices = @transform_3, window_bounds = array<i64: 10, 4>}, {pipeline_mode = #tpu.pipeline_mode<synchronous>, transform_indices = @transform_4, window_bounds = array<i64: 10, 1>}, {transform_indices = @transform_5, window_bounds = array<i64: 10, 16>}]} {
    %c0 = arith.constant 0 : index
    %c0_0 = arith.constant 0 : index
    %0 = vector.load %arg1[%c0, %c0_0] : memref<16x40xf32, #tpu.memory_space<vmem>>, vector<16x40xf32>
    %c0_1 = arith.constant 0 : index
    %c0_2 = arith.constant 0 : index
    %1 = vector.load %arg2[%c0_1, %c0_2] : memref<4x40xf32, #tpu.memory_space<vmem>>, vector<4x40xf32>
    %cst = arith.constant dense<0.000000e+00> : vector<4x16xf32>
    %2 = tpu.matmul %1, %0, %cst {dimension_numbers = #tpu.dot_dimension_numbers<[1], [1], [0], [0], [0, 0, 1, 0], [], []>} : vector<4x40xf32>, vector<16x40xf32>, vector<4x16xf32> -> vector<4x16xf32>
    %c0_3 = arith.constant 0 : index
    %c0_4 = arith.constant 0 : index
    %3 = vector.load %arg3[%c0_3, %c0_4] : memref<4x1xf32, #tpu.memory_space<vmem>>, vector<4x1xf32>
    %4 = vector.broadcast %3 : vector<4x1xf32> to vector<4x16xf32>
    %5 = arith.addf %2, %4 : vector<4x16xf32>
    %cst_5 = arith.constant 0.000000e+00 : f32
    %6 = vector.broadcast %cst_5 : f32 to vector<4x16xf32>
    %7 = arith.maximumf %5, %6 : vector<4x16xf32>
    %c0_6 = arith.constant 0 : index
    %c0_7 = arith.constant 0 : index
    %8 = vector.load %arg4[%c0_6, %c0_7] : memref<10x4xf32, #tpu.memory_space<vmem>>, vector<10x4xf32>
    %cst_8 = arith.constant dense<0.000000e+00> : vector<10x16xf32>
    %9 = tpu.matmul %8, %7, %cst_8 {dimension_numbers = #tpu.dot_dimension_numbers<[1], [0], [0], [1], [0, 0, 1, 1], [], []>} : vector<10x4xf32>, vector<4x16xf32>, vector<10x16xf32> -> vector<10x16xf32>
    %c0_9 = arith.constant 0 : index
    %c0_10 = arith.constant 0 : index
    %10 = vector.load %arg5[%c0_9, %c0_10] : memref<10x1xf32, #tpu.memory_space<vmem>>, vector<10x1xf32>
    %11 = vector.broadcast %10 : vector<10x1xf32> to vector<10x16xf32>
    %12 = arith.addf %9, %11 : vector<10x16xf32>
    %cst_11 = arith.constant dense<0xFF800000> : vector<16xf32>
    %13 = vector.multi_reduction <maximumf>, %12, %cst_11 [0] : vector<10x16xf32> to vector<16xf32>
    %14 = vector.shape_cast %13 : vector<16xf32> to vector<1x16xf32>
    %15 = vector.broadcast %14 : vector<1x16xf32> to vector<10x16xf32>
    %16 = arith.subf %12, %15 : vector<10x16xf32>
    %17 = math.exp %16 : vector<10x16xf32>
    %cst_12 = arith.constant dense<0.000000e+00> : vector<16xf32>
    %18 = vector.multi_reduction <add>, %17, %cst_12 [0] : vector<10x16xf32> to vector<16xf32>
    %19 = vector.shape_cast %18 : vector<16xf32> to vector<1x16xf32>
    %20 = tpu.reciprocal %19 {approx = true} : vector<1x16xf32> -> vector<1x16xf32>
    %21 = arith.mulf %19, %20 : vector<1x16xf32>
    %cst_13 = arith.constant 2.000000e+00 : f32
    %22 = vector.broadcast %cst_13 : f32 to vector<1x16xf32>
    %23 = arith.subf %22, %21 : vector<1x16xf32>
    %24 = arith.mulf %20, %23 : vector<1x16xf32>
    %25 = arith.mulf %19, %24 : vector<1x16xf32>
    %cst_14 = arith.constant 2.000000e+00 : f32
    %26 = vector.broadcast %cst_14 : f32 to vector<1x16xf32>
    %27 = arith.subf %26, %25 : vector<1x16xf32>
    %28 = arith.mulf %24, %27 : vector<1x16xf32>
    %29 = vector.broadcast %28 : vector<1x16xf32> to vector<10x16xf32>
    %30 = arith.mulf %17, %29 : vector<10x16xf32>
    %c0_15 = arith.constant 0 : index
    %c0_16 = arith.constant 0 : index
    %31 = vector.load %arg6[%c0_15, %c0_16] : memref<10x16xf32, #tpu.memory_space<vmem>>, vector<10x16xf32>
    tpu.vector_store %arg6[%c0_15, %c0_16], %30 {strides = array<i32>} : memref<10x16xf32, #tpu.memory_space<vmem>>, vector<10x16xf32>,
    return
  }
  func.func @transform_0(%arg0: i32) -> (i32, i32) {
    %c0_i32 = arith.constant 0 : i32
    %c0_i32_0 = arith.constant 0 : i32
    return %arg0, %c0_i32 : i32, i32
  }
  func.func @transform_1(%arg0: i32) -> (i32, i32) {
    %c0_i32 = arith.constant 0 : i32
    %c0_i32_0 = arith.constant 0 : i32
    %c0_i32_1 = arith.constant 0 : i32
    return %c0_i32, %c0_i32_0 : i32, i32
  }
  func.func @transform_2(%arg0: i32) -> (i32, i32) {
    %c0_i32 = arith.constant 0 : i32
    %c0_i32_0 = arith.constant 0 : i32
    %c0_i32_1 = arith.constant 0 : i32
    return %c0_i32, %c0_i32_0 : i32, i32
  }
  func.func @transform_3(%arg0: i32) -> (i32, i32) {
    %c0_i32 = arith.constant 0 : i32
    %c0_i32_0 = arith.constant 0 : i32
    %c0_i32_1 = arith.constant 0 : i32
    return %c0_i32, %c0_i32_0 : i32, i32
  }
  func.func @transform_4(%arg0: i32) -> (i32, i32) {
    %c0_i32 = arith.constant 0 : i32
    %c0_i32_0 = arith.constant 0 : i32
    %c0_i32_1 = arith.constant 0 : i32
    return %c0_i32, %c0_i32_0 : i32, i32
  }
  func.func @transform_5(%arg0: i32) -> (i32, i32) {
    %c0_i32 = arith.constant 0 : i32
    %c0_i32_0 = arith.constant 0 : i32
    return %c0_i32, %arg0 : i32, i32
  }
}

</mosaic_0001>

<llo_original>
// kernel: tpu_custom_call.1
$region0: #{tpu_custom_call.1}
  #allocation0 [shape = 'u32[]', space=smem, size = 0x4, offset = 0x4, fixed_abs, tag = 'smem constant byte address 0x4 - core index']
  #allocation1 [shape = 'u32[144,128]{1,0:T(1,128)}', space=vmem, size = 0x12000, scoped, tag = 'internal scratch']
  %s0 = inlined_call_operand.vmem [shape: f32[16,40], index: 0, kind: input, shape index: {}]
  %s1 = inlined_call_operand.vmem [shape: f32[4,40], index: 1, kind: input, shape index: {}]
  %s2 = inlined_call_operand.vmem [shape: f32[4,1], index: 2, kind: input, shape index: {}]
  %s3 = inlined_call_operand.vmem [shape: f32[10,4], index: 3, kind: input, shape index: {}]
  %s4 = inlined_call_operand.vmem [shape: f32[10,1], index: 4, kind: input, shape index: {}]
  %s5 = inlined_call_operand.hbm [shape: f32[10,16], index: 5, kind: output, shape index: {}]
  %s6 = sld [smem:[#allocation0]]
  $region30: #{tpu_custom_call.1} parent=0
    _
  %s8 = ssub.s32 1, %s6
  %s9 = scalar_select 0, %s8, %s6
  $region1: #{tpu_custom_call.1} parent=0
    #allocation2 [shape = 'u8[8192]{0}', space=vmem, size = 0x2000, scoped, tag = 'output window, operand 0, single buffered']
    #allocation3 [shape = 's32[1]{0}', space=sflag, size = 0x4, scoped, tag = 'scoped memory for tpu_custom_call.1']
    %10 = vsyncpa [#allocation3], 0
    // Predicated region
    $region2: #{tpu_custom_call.1} parent=1 // pred_check
      _
    $region3: #{tpu_custom_call.1} parent=1 // pred_check_branch
      %12 = sbr.rel (0) target = $region5
    $region4: #{tpu_custom_call.1} parent=1 // pred_region
      _
    $region5: #{tpu_custom_call.1} parent=1 // pred_fallthru
      _
    // Predicated region
    $region6: #{tpu_custom_call.1} parent=1 // pred_check
      _
    $region7: #{tpu_custom_call.1} parent=1 // pred_check_branch
      %14 = sbr.rel (0) target = $region9
    $region8: #{tpu_custom_call.1} parent=1 // pred_region
      _
    $region9: #{tpu_custom_call.1} parent=1 // pred_fallthru
      _
    // Predicated region
    $region10: #{tpu_custom_call.1} parent=1 // pred_check
      _
    $region11: #{tpu_custom_call.1} parent=1 // pred_check_branch
      %16 = sbr.rel (0) target = $region13
    $region12: #{tpu_custom_call.1} parent=1 // pred_region
      _
    $region13: #{tpu_custom_call.1} parent=1 // pred_fallthru
      _
    // Predicated region
    $region14: #{tpu_custom_call.1} parent=1 // pred_check
      _
    $region15: #{tpu_custom_call.1} parent=1 // pred_check_branch
      %18 = sbr.rel (0) target = $region17
    $region16: #{tpu_custom_call.1} parent=1 // pred_region
      _
    $region17: #{tpu_custom_call.1} parent=1 // pred_fallthru
      _
    // Predicated region
    $region18: #{tpu_custom_call.1} parent=1 // pred_check
      _
    $region19: #{tpu_custom_call.1} parent=1 // pred_check_branch
      %20 = sbr.rel (0) target = $region21
    $region20: #{tpu_custom_call.1} parent=1 // pred_region
      _
    $region21: #{tpu_custom_call.1} parent=1 // pred_fallthru
      _
    %v21 = vld [vmem:[%s0] sm:$0xff]
    %v22 = vld [vmem:[%s0 + $0x8] sm:$0xff]
    %v23 = vld [vmem:[%s1] sm:$0xf]
    %v24 = vld [vmem:[%s2] sm:$0xf]
    %26 = vset.pattern.permute.xlu0 0
    %27 = vperm.xlu0 %26, %v24
    %v28 = vpop.permute.xlu0 %27
    %vm30 = vcmask 326656
    %v32 = vsel %vm30, %v23, 0
    %v35 = vsel %vm30, %v21, 0
    %v38 = vsel %vm30, %v22, 0
    %40 = vmatprep.subr.mxu0 0.0
    %41 = vmatpush1.xpose.msra.mxu0 %v35
    %42 = vmatprep.subr.mxu0 0.0
    %43 = vmatpush1.xpose.msra.mxu0 %v38
    %44 = vmatprep.subr.mxu0 0.0
    %45 = vmatpush1.xpose.msra.mxu0 0.0
    %46 = vmatprep.subr.mxu0 0.0
    %47 = vmatpush1.xpose.msra.mxu0 0.0
    %48 = vmatprep.subr.mxu0 0.0
    %49 = vmatpush1.xpose.msra.mxu0 0.0
    %50 = vmatprep.subr.mxu0 0.0
    %51 = vmatpush1.xpose.msra.mxu0 0.0
    %52 = vmatprep.subr.mxu0 0.0
    %53 = vmatpush1.xpose.msra.mxu0 0.0
    %54 = vmatprep.subr.mxu0 0.0
    %55 = vmatpush1.xpose.msra.mxu0 0.0
    %56 = vmatprep.subr.mxu0 0.0
    %57 = vmatpush1.xpose.msra.mxu0 0.0
    %58 = vmatprep.subr.mxu0 0.0
    %59 = vmatpush1.xpose.msra.mxu0 0.0
    %60 = vmatprep.subr.mxu0 0.0
    %61 = vmatpush1.xpose.msra.mxu0 0.0
    %62 = vmatprep.subr.mxu0 0.0
    %63 = vmatpush1.xpose.msra.mxu0 0.0
    %64 = vmatprep.subr.mxu0 0.0
    %65 = vmatpush1.xpose.msra.mxu0 0.0
    %66 = vmatprep.subr.mxu0 0.0
    %67 = vmatpush1.xpose.msra.mxu0 0.0
    %68 = vmatprep.subr.mxu0 0.0
    %69 = vmatpush1.xpose.msra.mxu0 0.0
    %70 = vmatprep.subr.mxu0 0.0
    %71 = vmatpush1.xpose.msra.mxu0 0.0
    %72 = vmatprep.subr.mxu0 0.0
    %73 = vmatpush1.xpose.msra.mxu0 0.0
    %74 = vmatprep.subr.mxu0 0.0
    %75 = vmatpush1.xpose.msra.mxu0 0.0
    %76 = vmatprep.subr.mxu0 0.0
    %77 = vmatpush1.xpose.msra.mxu0 0.0
    %78 = vmatprep.subr.mxu0 0.0
    %79 = vmatpush1.xpose.msra.mxu0 0.0
    %80 = vmatprep.subr.mxu0 0.0
    %81 = vmatpush1.xpose.msra.mxu0 0.0
    %82 = vmatprep.subr.mxu0 0.0
    %83 = vmatpush1.xpose.msra.mxu0 0.0
    %84 = vmatprep.subr.mxu0 0.0
    %85 = vmatpush1.xpose.msra.mxu0 0.0
    %86 = vmatprep.subr.mxu0 0.0
    %87 = vmatpush1.xpose.msra.mxu0 0.0
    %88 = vmatprep.subr.mxu0 0.0
    %89 = vmatpush1.xpose.msra.mxu0 0.0
    %90 = vmatprep.subr.mxu0 0.0
    %91 = vmatpush1.xpose.msra.mxu0 0.0
    %92 = vmatprep.subr.mxu0 0.0
    %93 = vmatpush1.xpose.msra.mxu0 0.0
    %94 = vmatprep.subr.mxu0 0.0
    %95 = vmatpush1.xpose.msra.mxu0 0.0
    %96 = vmatprep.subr.mxu0 0.0
    %97 = vmatpush1.xpose.msra.mxu0 0.0
    %98 = vmatprep.subr.mxu0 0.0
    %99 = vmatpush1.xpose.msra.mxu0 0.0
    %100 = vmatprep.subr.mxu0 0.0
    %101 = vmatpush1.xpose.msra.mxu0 0.0
    %102 = vmatprep.subr.mxu0 0.0
    %103 = vmatpush1.xpose.msra.mxu0 0.0
    %104 = vmatprep.mubr.f32.mxu0 0.0
    %105 = vmatmul.mubr.f32.gmra.mrb[0].mxu0 %v32
    %v106 = vpop.f32.mrb[0].mxu0
    %v107 = vadd.f32 %v28, %v106
    %v108 = vpop.f32.mrb[0].mxu0
    %109 = vdwg.mxu0
    %v110 = vmax.f32 %v107, 0.0
    %v111 = vld [vmem:[%s3] sm:$0xff]
    %v112 = vld [vmem:[%s3 + $0x8] sm:$0x3]
    %v113 = vld [vmem:[%s4] sm:$0xff]
    %v114 = vld [vmem:[%s4 + $0x8] sm:$0x3]
    %116 = vset.pattern.permute.xlu0 0
    %117 = vperm.xlu0 %116, %v113
    %v118 = vpop.permute.xlu0 %117
    %121 = vset.pattern.permute.xlu0 0
    %122 = vperm.xlu0 %121, %v114
    %v123 = vpop.permute.xlu0 %122
    %vm125 = vcmask 31744
    %v127 = vsel %vm125, %v111, 0
    %v130 = vsel %vm125, %v112, 0
    %vm132 = vcmask 1043456
    %v134 = vsel %vm132, %v110, 0
    %136 = vmatprep.subr.mxu0 0.0
    %137 = vmatpush1.msra.mxu0 %v134
    %138 = vmatprep.subr.mxu0 0.0
    %139 = vmatpush1.msra.mxu0 0.0
    %140 = vmatprep.subr.mxu0 0.0
    %141 = vmatpush1.msra.mxu0 0.0
    %142 = vmatprep.subr.mxu0 0.0
    %143 = vmatpush1.msra.mxu0 0.0
    %144 = vmatprep.subr.mxu0 0.0
    %145 = vmatpush1.msra.mxu0 0.0
    %146 = vmatprep.subr.mxu0 0.0
    %147 = vmatpush1.msra.mxu0 0.0
    %148 = vmatprep.subr.mxu0 0.0
    %149 = vmatpush1.msra.mxu0 0.0
    %150 = vmatprep.subr.mxu0 0.0
    %151 = vmatpush1.msra.mxu0 0.0
    %152 = vmatprep.subr.mxu0 0.0
    %153 = vmatpush1.msra.mxu0 0.0
    %154 = vmatprep.subr.mxu0 0.0
    %155 = vmatpush1.msra.mxu0 0.0
    %156 = vmatprep.subr.mxu0 0.0
    %157 = vmatpush1.msra.mxu0 0.0
    %158 = vmatprep.subr.mxu0 0.0
    %159 = vmatpush1.msra.mxu0 0.0
    %160 = vmatprep.subr.mxu0 0.0
    %161 = vmatpush1.msra.mxu0 0.0
    %162 = vmatprep.subr.mxu0 0.0
    %163 = vmatpush1.msra.mxu0 0.0
    %164 = vmatprep.subr.mxu0 0.0
    %165 = vmatpush1.msra.mxu0 0.0
    %166 = vmatprep.subr.mxu0 0.0
    %167 = vmatpush1.msra.mxu0 0.0
    %168 = vmatprep.subr.mxu0 0.0
    %169 = vmatpush1.msra.mxu0 0.0
    %170 = vmatprep.subr.mxu0 0.0
    %171 = vmatpush1.msra.mxu0 0.0
    %172 = vmatprep.subr.mxu0 0.0
    %173 = vmatpush1.msra.mxu0 0.0
    %174 = vmatprep.subr.mxu0 0.0
    %175 = vmatpush1.msra.mxu0 0.0
    %176 = vmatprep.subr.mxu0 0.0
    %177 = vmatpush1.msra.mxu0 0.0
    %178 = vmatprep.subr.mxu0 0.0
    %179 = vmatpush1.msra.mxu0 0.0
    %180 = vmatprep.subr.mxu0 0.0
    %181 = vmatpush1.msra.mxu0 0.0
    %182 = vmatprep.subr.mxu0 0.0
    %183 = vmatpush1.msra.mxu0 0.0
    %184 = vmatprep.subr.mxu0 0.0
    %185 = vmatpush1.msra.mxu0 0.0
    %186 = vmatprep.subr.mxu0 0.0
    %187 = vmatpush1.msra.mxu0 0.0
    %188 = vmatprep.subr.mxu0 0.0
    %189 = vmatpush1.msra.mxu0 0.0
    %190 = vmatprep.subr.mxu0 0.0
    %191 = vmatpush1.msra.mxu0 0.0
    %192 = vmatprep.subr.mxu0 0.0
    %193 = vmatpush1.msra.mxu0 0.0
    %194 = vmatprep.subr.mxu0 0.0
    %195 = vmatpush1.msra.mxu0 0.0
    %196 = vmatprep.subr.mxu0 0.0
    %197 = vmatpush1.msra.mxu0 0.0
    %198 = vmatprep.subr.mxu0 0.0
    %199 = vmatpush1.msra.mxu0 0.0
    %200 = vmatprep.mubr.f32.mxu0 0.0
    %201 = vmatmul.mubr.f32.gmra.mrb[0].mxu0 %v127
    %v202 = vpop.f32.mrb[0].mxu0
    %v203 = vadd.f32 %v118, %v202
    %v204 = vpop.f32.mrb[0].mxu0
    %205 = vmatprep.mubr.f32.mxu0 0.0
    %206 = vmatmul.mubr.f32.gmra.mrb[0].mxu0 %v130
    %v207 = vpop.f32.mrb[0].mxu0
    %v208 = vadd.f32 %v123, %v207
    %v209 = vpop.f32.mrb[0].mxu0
    %210 = vdwg.mxu0
    %vm211 = vcmask 130048
    %v212 = vsel %vm211, %v203, -inf
    %vm213 = vcmask 123904
    %v214 = vsel %vm213, %v208, -inf
    %v215 = vmax.f32 %v212, %v214
    %v216 = vrot.slane %v215, 4
    %v217 = vmax.f32 %v215, %v216
    %v218 = vrot.slane %v217, 2
    %v219 = vmax.f32 %v217, %v218
    %v220 = vrot.slane %v219, 1
    %v221 = vmax.f32 %v219, %v220
    %v222 = vsub.f32 %v203, %v221
    %v223 = vsub.f32 %v208, %v221
    %v224 = vmul.f32 %v222, 1.442695
    %v225 = vpow.pop %v224
    %v226 = vmul.f32 %v223, 1.442695
    %v227 = vpow.pop %v226
    %v228 = vsel %vm211, %v225, 0.0
    %v229 = vsel %vm213, %v227, 0.0
    %v230 = vadd.f32 %v228, %v229
    %v231 = vrot.slane %v230, 4
    %v232 = vadd.f32 %v230, %v231
    %v233 = vrot.slane %v232, 2
    %v234 = vadd.f32 %v232, %v233
    %v235 = vrot.slane %v234, 1
    %v236 = vadd.f32 %v234, %v235
    %v237 = vrcp.pop %v236
    %v238 = vmul.f32 %v236, %v237
    %v239 = vsub.f32 2.0, %v238
    %v240 = vmul.f32 %v237, %v239
    %v241 = vmul.f32 %v236, %v240
    %v242 = vsub.f32 2.0, %v241
    %v243 = vmul.f32 %v240, %v242
    %v244 = vmul.f32 %v225, %v243
    %v245 = vmul.f32 %v227, %v243
    %246 = vst.msk [vmem:[#allocation2] sm:$0xff] %vm211, %v244
    %247 = vst.msk [vmem:[#allocation2 + $0x8] sm:$0x3] %vm213, %v245
    // Predicated region
    $region22: #{tpu_custom_call.1} parent=1 // pred_check
      _
    $region23: #{tpu_custom_call.1} parent=1 // pred_check_branch
      %249 = sbr.rel (0) target = $region25
    $region24: #{tpu_custom_call.1} parent=1 // pred_region
      %s251 = ssub.s32 256, 256
      %252 = vsyncadd [#allocation3], %s251
      %s253 = sshll.u32 [#allocation2], 4
      %s254 = int_to_ptr.vmem [resolvable:$true] %s253
      %259 = dma.vmem_to_hbm [thread:$0]  %s254, 256, %s5, [#allocation3], 128, 128, 8
    $region25: #{tpu_custom_call.1} parent=1 // pred_fallthru
      _
    // Predicated region
    $region26: #{tpu_custom_call.1} parent=1 // pred_check
      _
    $region27: #{tpu_custom_call.1} parent=1 // pred_check_branch
      %261 = sbr.rel (0) target = $region29
    $region28: #{tpu_custom_call.1} parent=1 // pred_region
      %262 = dma.done [#allocation3], 256
    $region29: #{tpu_custom_call.1} parent=1 // pred_fallthru
      _
    %263 = vsyncpa [#allocation3], 1

</llo_original>
